<compile_context>
chip_gen: v5e
topology: v5e:2x2
jax: 0.10.0
libtpu: 0.0.40
codegen_flags: <defaults>
</compile_context>

<pallas_src>
import functools

import jax
import jax.numpy as jnp
from jax.experimental import pallas as pl
from jax.experimental.pallas import tpu as pltpu

_LANES = 128


def _se_kernel(x_ref, sb_ref, w1e_ref, b1_ref, w2_ref, b2_ref, o_ref, acc_ref,
               *, tile_cols, hw_total, needs_mask):
    k = pl.program_id(1)

    # ---- init the per-row partial-sum accumulator at the start of each pass.
    @pl.when(k == 0)
    def _init():
        acc_ref[...] = jnp.zeros_like(acc_ref)

    # ---- streamed accumulation: lane-wise f32 VPU adds only (no per-chunk
    #      cross-lane reduce, no full-chunk f32 materialization).
    chunk = x_ref[...]                                   # (rows, tile_cols)
    acc = acc_ref[...]                                   # (rows, 128) f32
    rows = chunk.shape[0]

    if needs_mask:   # static: only when H*W is not a multiple of tile_cols
        lane_ids = jax.lax.broadcasted_iota(jnp.int32, (rows, _LANES), 1)
        col_base = k * tile_cols

    n_full = tile_cols // _LANES
    for j in range(n_full):
        piece = chunk[:, j * _LANES:(j + 1) * _LANES].astype(jnp.float32)
        if needs_mask:
            valid = (col_base + j * _LANES + lane_ids) < hw_total
            piece = jnp.where(valid, piece, 0.0)
        acc = acc + piece

    rem = tile_cols - n_full * _LANES
    if rem:          # static: only when H*W < 128 (single, full-width block)
        tail = jnp.sum(chunk[:, n_full * _LANES:].astype(jnp.float32),
                       axis=-1, keepdims=True)
        acc = acc + tail * (1.0 / _LANES)   # exact spread (divide by 2**7)

    acc_ref[...] = acc

    # ---- epilogue: one XLU reduce + two tiny MXU matmuls + sigmoid gate.
    @pl.when(k == pl.num_programs(1) - 1)
    def _finalize():
        row_sum = jnp.sum(acc_ref[...], axis=-1, keepdims=True)   # (rows, 1)
        # FC1 (1x1 conv C->number): the 1/(H*W) mean scale is folded into w1e;
        # sb maps the flattened (n, c) rows back onto their batch row, so no
        # in-kernel reshape is required.
        h = jnp.dot(sb_ref[...], row_sum * w1e_ref[...],
                    preferred_element_type=jnp.float32) + b1_ref[...]
        # FC2 (1x1 conv number->C) + sigmoid.
        y = jnp.dot(h, w2_ref[...],
                    preferred_element_type=jnp.float32) + b2_ref[...]
        o_ref[...] = jax.nn.sigmoid(y).astype(o_ref.dtype)


def se_module(x, w1, b1, w2, b2, *, max_lane_tile=2048):
    """SEModule forward.

    x:  (N, C, H, W)   NCHW, like PyTorch
    w1: (number, C)    first 1x1 conv weight (PyTorch (out, in, 1, 1) squeezed)
    b1: (number,)
    w2: (C, number)    second 1x1 conv weight
    b2: (C,)
    Returns the sigmoid gate, shape (N, C, 1, 1).
    """
    N, C, H, W = x.shape
    number = w1.shape[0]
    HW = H * W
    rows = N * C
    itemsize = jnp.dtype(x.dtype).itemsize

    # ---- batch row-blocking: leading "parallel" grid axis (v7x megacore).
    # Only split when the per-block (bn, C) output stays (8,128)-legal.
    nb = 1
    for cand in (8, 4, 2):
        if N % cand == 0 and (N // cand) % 8 == 0:
            nb = cand
            break
    bn = N // nb                 # batches per row block
    rpb = bn * C                 # rows of x_2d per row block

    # ---- spatial tile: wide multiple of 128, sized to a per-buffer VMEM
    # budget (the pipeline double-buffers the x chunk).
    per_buf_budget = 8 * 1024 * 1024
    lane_cap = (per_buf_budget // max(1, rpb * itemsize)) // _LANES * _LANES
    lane_cap = max(_LANES, min(max_lane_tile, lane_cap))
    if HW >= _LANES:
        tc = max(_LANES, min(lane_cap, (HW // _LANES) * _LANES))
    else:
        tc = HW                  # single full-width block (legal: equals dim)
    kt = pl.cdiv(HW, tc)
    needs_mask = (HW % tc) != 0  # edge chunk is padded -> mask invalid lanes

    # ---- one-time wrapper-side weight prep (free):
    #  * pre-transpose both conv weights (no in-kernel .T)
    #  * fold the 1/(H*W) mean scale into the first weight
    #  * W1e tiles w1^T per batch group and Sb is the 0/1 "row -> batch"
    #    selection matrix, so FC1 consumes the flattened row sums directly.
    w1s = w1.astype(jnp.float32).T / float(HW)                     # (C, number)
    w1e = jnp.tile(w1s, (bn, 1))                                   # (rpb, number)
    sb = (jnp.arange(rpb, dtype=jnp.int32)[None, :] // C
          == jnp.arange(bn, dtype=jnp.int32)[:, None]).astype(jnp.float32)
    w2s = w2.astype(jnp.float32).T                                 # (number, C)
    b1_2d = b1.astype(jnp.float32).reshape(1, number)
    b2_2d = b2.astype(jnp.float32).reshape(1, C)

    x_2d = x.reshape(rows, HW)

    x_tile_bytes = rpb * tc * itemsize
    acc_bytes = rpb * _LANES * 4
    vmem_limit = int(min(64 * 1024 * 1024,
                         max(8 * 1024 * 1024,
                             2 * x_tile_bytes + acc_bytes + 2 * 1024 * 1024)))

    kernel = functools.partial(_se_kernel, tile_cols=tc, hw_total=HW,
                               needs_mask=needs_mask)

    out = pl.pallas_call(
        kernel,
        out_shape=jax.ShapeDtypeStruct((N, C), x.dtype),
        grid=(nb, kt),
        in_specs=[
            pl.BlockSpec((rpb, tc), lambda i, k: (i, k)),       # x (streamed)
            pl.BlockSpec((bn, rpb), lambda i, k: (0, 0)),       # Sb
            pl.BlockSpec((rpb, number), lambda i, k: (0, 0)),   # W1e (scaled)
            pl.BlockSpec((1, number), lambda i, k: (0, 0)),     # b1
            pl.BlockSpec((number, C), lambda i, k: (0, 0)),     # w2^T
            pl.BlockSpec((1, C), lambda i, k: (0, 0)),          # b2
        ],
        out_specs=pl.BlockSpec((bn, C), lambda i, k: (i, 0)),
        scratch_shapes=[pltpu.VMEM((rpb, _LANES), jnp.float32)],
        compiler_params=pltpu.CompilerParams(
            dimension_semantics=("parallel", "arbitrary"),
            vmem_limit_bytes=vmem_limit),
    )(x_2d, sb, w1e, b1_2d, w2s, b2_2d)

    return out.reshape(N, C, 1, 1)


def _reference(x, w1, b1, w2, b2):
    pooled = jnp.mean(x.astype(jnp.float32), axis=(2, 3))          # (N, C)
    h = pooled @ w1.astype(jnp.float32).T + b1.astype(jnp.float32)
    y = h @ w2.astype(jnp.float32).T + b2.astype(jnp.float32)
    return jax.nn.sigmoid(y).reshape(x.shape[0], x.shape[1], 1, 1).astype(x.dtype)


if __name__ == "__main__":
    # SEModule(out_planes=4, number=2) on a (2, 4, 16, 16) NCHW input.
    N, C, number, H, W = 2, 4, 2, 16, 16

    key = jax.random.PRNGKey(0)
    kx, kw1, kb1, kw2, kb2 = jax.random.split(key, 5)

    x = jax.random.normal(kx, (N, C, H, W), dtype=jnp.float32)
    # Conv2d 1x1 weights: PyTorch shape (out_ch, in_ch, 1, 1) -> squeezed to 2D.
    w1 = jax.random.normal(kw1, (number, C), dtype=jnp.float32) * 0.1
    b1 = jax.random.normal(kb1, (number,), dtype=jnp.float32) * 0.1
    w2 = jax.random.normal(kw2, (C, number), dtype=jnp.float32) * 0.1
    b2 = jax.random.normal(kb2, (C,), dtype=jnp.float32) * 0.1

    out = se_module(x, w1, b1, w2, b2)
    jax.block_until_ready(out)

    ref = _reference(x, w1, b1, w2, b2)
    assert out.shape == (N, C, 1, 1)
    assert jnp.allclose(out, ref, atol=1e-5, rtol=1e-5), "mismatch vs reference"

    print("KERNEL_OK")
</pallas_src>

<mosaic_0001>
module attributes {stable_mosaic.version = 11 : i64} {
  func.func @_se_kernel(%arg0: i32, %arg1: i32, %arg2: memref<8x256xf32, #tpu.memory_space<vmem>>, %arg3: memref<2x8xf32, #tpu.memory_space<vmem>>, %arg4: memref<8x2xf32, #tpu.memory_space<vmem>>, %arg5: memref<1x2xf32, #tpu.memory_space<vmem>>, %arg6: memref<2x4xf32, #tpu.memory_space<vmem>>, %arg7: memref<1x4xf32, #tpu.memory_space<vmem>>, %arg8: memref<2x4xf32, #tpu.memory_space<vmem>>, %arg9: memref<8x128xf32, #tpu.memory_space<vmem>>) attributes {dimension_semantics = [#tpu.dimension_semantics<parallel>, #tpu.dimension_semantics<arbitrary>], iteration_bounds = array<i64: 1, 1>, scalar_prefetch = 0 : i64, scratch_operands = 1 : i64, tpu.core_type = #tpu.core_type<tc>, window_params = [{transform_indices = @transform_0, window_bounds = array<i64: 8, 256>}, {pipeline_mode = #tpu.pipeline_mode<synchronous>, transform_indices = @transform_1, window_bounds = array<i64: 2, 8>}, {pipeline_mode = #tpu.pipeline_mode<synchronous>, transform_indices = @transform_2, window_bounds = array<i64: 8, 2>}, {pipeline_mode = #tpu.pipeline_mode<synchronous>, transform_indices = @transform_3, window_bounds = array<i64: 1, 2>}, {pipeline_mode = #tpu.pipeline_mode<synchronous>, transform_indices = @transform_4, window_bounds = array<i64: 2, 4>}, {pipeline_mode = #tpu.pipeline_mode<synchronous>, transform_indices = @transform_5, window_bounds = array<i64: 1, 4>}, {transform_indices = @transform_6, window_bounds = array<i64: 2, 4>}]} {
    %c0_i32 = arith.constant 0 : i32
    %0 = arith.cmpi eq, %arg1, %c0_i32 : i32
    %1 = arith.extui %0 : i1 to i32
    %c0_i32_0 = arith.constant 0 : i32
    %2 = arith.cmpi ne, %1, %c0_i32_0 : i32
    scf.if %2 {
      %cst = arith.constant 0.000000e+00 : f32
      %13 = vector.broadcast %cst : f32 to vector<8x128xf32>
      %c0_8 = arith.constant 0 : index
      %c0_9 = arith.constant 0 : index
      %14 = vector.load %arg9[%c0_8, %c0_9] : memref<8x128xf32, #tpu.memory_space<vmem>>, vector<8x128xf32>
      tpu.vector_store %arg9[%c0_8, %c0_9], %13 {strides = array<i32>} : memref<8x128xf32, #tpu.memory_space<vmem>>, vector<8x128xf32>,
    } else {
    }
    %c0 = arith.constant 0 : index
    %c0_1 = arith.constant 0 : index
    %3 = vector.load %arg2[%c0, %c0_1] : memref<8x256xf32, #tpu.memory_space<vmem>>, vector<8x256xf32>
    %c0_2 = arith.constant 0 : index
    %c0_3 = arith.constant 0 : index
    %4 = vector.load %arg9[%c0_2, %c0_3] : memref<8x128xf32, #tpu.memory_space<vmem>>, vector<8x128xf32>
    %5 = vector.extract_strided_slice %3 {offsets = [0, 0], sizes = [8, 128], strides = [1, 1]} : vector<8x256xf32> to vector<8x128xf32>
    %6 = arith.addf %4, %5 : vector<8x128xf32>
    %7 = vector.extract_strided_slice %3 {offsets = [0, 128], sizes = [8, 128], strides = [1, 1]} : vector<8x256xf32> to vector<8x128xf32>
    %8 = arith.addf %6, %7 : vector<8x128xf32>
    %c0_4 = arith.constant 0 : index
    %c0_5 = arith.constant 0 : index
    %9 = vector.load %arg9[%c0_4, %c0_5] : memref<8x128xf32, #tpu.memory_space<vmem>>, vector<8x128xf32>
    tpu.vector_store %arg9[%c0_4, %c0_5], %8 {strides = array<i32>} : memref<8x128xf32, #tpu.memory_space<vmem>>, vector<8x128xf32>,
    %c0_i32_6 = arith.constant 0 : i32
    %10 = arith.cmpi eq, %arg1, %c0_i32_6 : i32
    %11 = arith.extui %10 : i1 to i32
    %c0_i32_7 = arith.constant 0 : i32
    %12 = arith.cmpi ne, %11, %c0_i32_7 : i32
    scf.if %12 {
      %c0_8 = arith.constant 0 : index
      %c0_9 = arith.constant 0 : index
      %13 = vector.load %arg9[%c0_8, %c0_9] : memref<8x128xf32, #tpu.memory_space<vmem>>, vector<8x128xf32>
      %cst = arith.constant dense<0.000000e+00> : vector<8xf32>
      %14 = vector.multi_reduction <add>, %13, %cst [1] : vector<8x128xf32> to vector<8xf32>
      %15 = vector.shape_cast %14 : vector<8xf32> to vector<8x1xf32>
      %c0_10 = arith.constant 0 : index
      %c0_11 = arith.constant 0 : index
      %16 = vector.load %arg3[%c0_10, %c0_11] : memref<2x8xf32, #tpu.memory_space<vmem>>, vector<2x8xf32>
      %c0_12 = arith.constant 0 : index
      %c0_13 = arith.constant 0 : index
      %17 = vector.load %arg4[%c0_12, %c0_13] : memref<8x2xf32, #tpu.memory_space<vmem>>, vector<8x2xf32>
      %18 = vector.broadcast %15 : vector<8x1xf32> to vector<8x2xf32>
      %19 = arith.mulf %18, %17 : vector<8x2xf32>
      %cst_14 = arith.constant dense<0.000000e+00> : vector<2x2xf32>
      %20 = tpu.matmul %16, %19, %cst_14 {dimension_numbers = #tpu.dot_dimension_numbers<[1], [0], [0], [1], [0, 0, 1, 1], [], []>} : vector<2x8xf32>, vector<8x2xf32>, vector<2x2xf32> -> vector<2x2xf32>
      %c0_15 = arith.constant 0 : index
      %c0_16 = arith.constant 0 : index
      %21 = vector.load %arg5[%c0_15, %c0_16] : memref<1x2xf32, #tpu.memory_space<vmem>>, vector<1x2xf32>
      %22 = vector.broadcast %21 : vector<1x2xf32> to vector<2x2xf32>
      %23 = arith.addf %20, %22 : vector<2x2xf32>
      %c0_17 = arith.constant 0 : index
      %c0_18 = arith.constant 0 : index
      %24 = vector.load %arg6[%c0_17, %c0_18] : memref<2x4xf32, #tpu.memory_space<vmem>>, vector<2x4xf32>
      %cst_19 = arith.constant dense<0.000000e+00> : vector<2x4xf32>
      %25 = tpu.matmul %23, %24, %cst_19 {dimension_numbers = #tpu.dot_dimension_numbers<[1], [0], [0], [1], [0, 0, 1, 1], [], []>} : vector<2x2xf32>, vector<2x4xf32>, vector<2x4xf32> -> vector<2x4xf32>
      %c0_20 = arith.constant 0 : index
      %c0_21 = arith.constant 0 : index
      %26 = vector.load %arg7[%c0_20, %c0_21] : memref<1x4xf32, #tpu.memory_space<vmem>>, vector<1x4xf32>
      %27 = vector.broadcast %26 : vector<1x4xf32> to vector<2x4xf32>
      %28 = arith.addf %25, %27 : vector<2x4xf32>
      %29 = arith.negf %28 : vector<2x4xf32>
      %30 = math.exp %29 : vector<2x4xf32>
      %cst_22 = arith.constant 1.000000e+00 : f32
      %31 = vector.broadcast %cst_22 : f32 to vector<2x4xf32>
      %32 = arith.addf %31, %30 : vector<2x4xf32>
      %33 = arith.divf %31, %32 : vector<2x4xf32>
      %c0_23 = arith.constant 0 : index
      %c0_24 = arith.constant 0 : index
      %34 = vector.load %arg8[%c0_23, %c0_24] : memref<2x4xf32, #tpu.memory_space<vmem>>, vector<2x4xf32>
      tpu.vector_store %arg8[%c0_23, %c0_24], %33 {strides = array<i32>} : memref<2x4xf32, #tpu.memory_space<vmem>>, vector<2x4xf32>,
    } else {
    }
    return
  }
  func.func @transform_0(%arg0: i32, %arg1: i32) -> (i32, i32) {
    %c0_i32 = arith.constant 0 : i32
    return %arg0, %arg1 : i32, i32
  }
  func.func @transform_1(%arg0: i32, %arg1: i32) -> (i32, i32) {
    %c0_i32 = arith.constant 0 : i32
    %c0_i32_0 = arith.constant 0 : i32
    %c0_i32_1 = arith.constant 0 : i32
    return %c0_i32, %c0_i32_0 : i32, i32
  }
  func.func @transform_2(%arg0: i32, %arg1: i32) -> (i32, i32) {
    %c0_i32 = arith.constant 0 : i32
    %c0_i32_0 = arith.constant 0 : i32
    %c0_i32_1 = arith.constant 0 : i32
    return %c0_i32, %c0_i32_0 : i32, i32
  }
  func.func @transform_3(%arg0: i32, %arg1: i32) -> (i32, i32) {
    %c0_i32 = arith.constant 0 : i32
    %c0_i32_0 = arith.constant 0 : i32
    %c0_i32_1 = arith.constant 0 : i32
    return %c0_i32, %c0_i32_0 : i32, i32
  }
  func.func @transform_4(%arg0: i32, %arg1: i32) -> (i32, i32) {
    %c0_i32 = arith.constant 0 : i32
    %c0_i32_0 = arith.constant 0 : i32
    %c0_i32_1 = arith.constant 0 : i32
    return %c0_i32, %c0_i32_0 : i32, i32
  }
  func.func @transform_5(%arg0: i32, %arg1: i32) -> (i32, i32) {
    %c0_i32 = arith.constant 0 : i32
    %c0_i32_0 = arith.constant 0 : i32
    %c0_i32_1 = arith.constant 0 : i32
    return %c0_i32, %c0_i32_0 : i32, i32
  }
  func.func @transform_6(%arg0: i32, %arg1: i32) -> (i32, i32) {
    %c0_i32 = arith.constant 0 : i32
    %c0_i32_0 = arith.constant 0 : i32
    return %arg0, %c0_i32 : i32, i32
  }
}

</mosaic_0001>

<llo_original>
// kernel: tpu_custom_call.1
$region0: #{tpu_custom_call.1}
  #allocation0 [shape = 'u32[]', space=smem, size = 0x4, offset = 0x4, fixed_abs, tag = 'smem constant byte address 0x4 - core index']
  #allocation1 [shape = 'u32[72,128]{1,0:T(1,128)}', space=vmem, size = 0x9000, scoped, tag = 'internal scratch']
  #allocation2 [shape = 'f32[8,128]{1,0:T(8,128)}', space=vmem, size = 0x1000, scoped, tag = 'scratch operand']
  %s0 = inlined_call_operand.hbm [shape: f32[8,256], index: 0, kind: input, shape index: {}]
  %s1 = inlined_call_operand.vmem [shape: f32[2,8], index: 1, kind: input, shape index: {}]
  %s2 = inlined_call_operand.vmem [shape: f32[8,2], index: 2, kind: input, shape index: {}]
  %s3 = inlined_call_operand.vmem [shape: f32[1,2], index: 3, kind: input, shape index: {}]
  %s4 = inlined_call_operand.vmem [shape: f32[2,4], index: 4, kind: input, shape index: {}]
  %s5 = inlined_call_operand.vmem [shape: f32[1,4], index: 5, kind: input, shape index: {}]
  %s6 = inlined_call_operand.hbm [shape: f32[2,4], index: 6, kind: output, shape index: {}]
  %s7 = sld [smem:[#allocation0]]
  $region46: #{tpu_custom_call.1} parent=0
    _
  %s9 = ssub.s32 1, %s7
  %s10 = scalar_select 0, %s9, %s7
  $region1: #{tpu_custom_call.1} parent=0
    #allocation3 [shape = 'u8[8192]{0}', space=vmem, size = 0x2000, scoped, tag = 'input window, operand 0, single buffered']
    #allocation4 [shape = 's32[1]{0}', space=sflag, size = 0x4, scoped, tag = 'scoped memory for tpu_custom_call.1']
    #allocation5 [shape = 's32[1]{0}', space=sflag, size = 0x4, scoped, tag = 'scoped memory for tpu_custom_call.1']
    #allocation6 [shape = 'u8[1024]{0}', space=vmem, size = 0x400, scoped, tag = 'output window, operand 0, single buffered']
    %11 = vsyncpa [#allocation4], 0
    %12 = vsyncpa [#allocation5], 0
    // Predicated region
    $region2: #{tpu_custom_call.1} parent=1 // pred_check
      _
    $region3: #{tpu_custom_call.1} parent=1 // pred_check_branch
      %14 = sbr.rel (0) target = $region5
    $region4: #{tpu_custom_call.1} parent=1 // pred_region
      %16 = vsyncadd [#allocation4], 0
      %s18 = sshll.u32 %s0, 4
      %s19 = int_to_ptr.hbm [resolvable:$true] %s18
      %s20 = sshll.u32 [#allocation3], 4
      %s21 = int_to_ptr.vmem [resolvable:$true] %s20
      %23 = dma.hbm_to_vmem [thread:$0]  %s19, 256, %s21, [#allocation4]
    $region5: #{tpu_custom_call.1} parent=1 // pred_fallthru
      _
    // Predicated region
    $region6: #{tpu_custom_call.1} parent=1 // pred_check
      _
    $region7: #{tpu_custom_call.1} parent=1 // pred_check_branch
      %25 = sbr.rel (0) target = $region9
    $region8: #{tpu_custom_call.1} parent=1 // pred_region
      _
    $region9: #{tpu_custom_call.1} parent=1 // pred_fallthru
      _
    // Predicated region
    $region10: #{tpu_custom_call.1} parent=1 // pred_check
      _
    $region11: #{tpu_custom_call.1} parent=1 // pred_check_branch
      %27 = sbr.rel (0) target = $region13
    $region12: #{tpu_custom_call.1} parent=1 // pred_region
      _
    $region13: #{tpu_custom_call.1} parent=1 // pred_fallthru
      _
    // Predicated region
    $region14: #{tpu_custom_call.1} parent=1 // pred_check
      _
    $region15: #{tpu_custom_call.1} parent=1 // pred_check_branch
      %29 = sbr.rel (0) target = $region17
    $region16: #{tpu_custom_call.1} parent=1 // pred_region
      _
    $region17: #{tpu_custom_call.1} parent=1 // pred_fallthru
      _
    // Predicated region
    $region18: #{tpu_custom_call.1} parent=1 // pred_check
      _
    $region19: #{tpu_custom_call.1} parent=1 // pred_check_branch
      %31 = sbr.rel (0) target = $region21
    $region20: #{tpu_custom_call.1} parent=1 // pred_region
      _
    $region21: #{tpu_custom_call.1} parent=1 // pred_fallthru
      _
    // Predicated region
    $region22: #{tpu_custom_call.1} parent=1 // pred_check
      _
    $region23: #{tpu_custom_call.1} parent=1 // pred_check_branch
      %33 = sbr.rel (0) target = $region25
    $region24: #{tpu_custom_call.1} parent=1 // pred_region
      _
    $region25: #{tpu_custom_call.1} parent=1 // pred_fallthru
      _
    // Predicated region
    $region26: #{tpu_custom_call.1} parent=1 // pred_check
      _
    $region27: #{tpu_custom_call.1} parent=1 // pred_check_branch
      %35 = sbr.rel (0) target = $region29
    $region28: #{tpu_custom_call.1} parent=1 // pred_region
      %37 = dma.done [#allocation4], 256
    $region29: #{tpu_custom_call.1} parent=1 // pred_fallthru
      _
    %p38 = scmp.eq.s32.totalorder 0, 0
    // Predicated region
    $region30: #{tpu_custom_call.1} parent=1 // pred_check
      %p39 = pneg %p38
    $region31: #{tpu_custom_call.1} parent=1 // pred_check_branch
      %41 = sbr.rel (%p39) target = $region33
    $region32: #{tpu_custom_call.1} parent=1 // pred_region
      %42 = vst [vmem:[#allocation2] sm:$0xff] 0.0
    $region33: #{tpu_custom_call.1} parent=1 // pred_fallthru
      _
    %v43 = vld [vmem:[#allocation3] sm:$0xff]
    %v44 = vld [vmem:[#allocation3 + $0x8] sm:$0xff]
    %v45 = vld [vmem:[#allocation2] sm:$0xff]
    %v46 = vadd.f32 %v45, %v43
    %v47 = vadd.f32 %v46, %v44
    %48 = vst [vmem:[#allocation2] sm:$0xff] %v47
    // Predicated region
    $region34: #{tpu_custom_call.1} parent=1 // pred_check
      %p49 = pneg %p38
    $region35: #{tpu_custom_call.1} parent=1 // pred_check_branch
      %51 = sbr.rel (%p49) target = $region37
    $region36: #{tpu_custom_call.1} parent=1 // pred_region
      %v52 = vld [vmem:[#allocation2] sm:$0xff]
      %53 = vadd.xlane.f32.xlu0 %v52
      %v54 = vpop.xlane.xlu0 %53
      %v55 = vld [vmem:[%s1] sm:$0x3]
      %v56 = vld [vmem:[%s2] sm:$0xff]
      %v57 = vmul.f32 %v54, %v56
      %v58 = vld [vmem:[%s3] sm:$0x1]
      %v60 = vperm.slane %v58, 0
      %vm62 = vcmask 64512
      %v64 = vsel %vm62, %v55, 0
      %66 = vmatpush.msra.mxu0 0.0
      %67 = vmatpush.msra.mxu0 0.0
      %68 = vmatpush.msra.mxu0 0.0
      %69 = vmatpush.msra.mxu0 0.0
      %70 = vmatpush.msra.mxu0 0.0
      %71 = vmatpush.msra.mxu0 0.0
      %72 = vmatpush.msra.mxu0 0.0
      %73 = vmatpush.msra.mxu0 0.0
      %74 = vmatpush.msra.mxu0 0.0
      %75 = vmatpush.msra.mxu0 0.0
      %76 = vmatpush.msra.mxu0 0.0
      %77 = vmatpush.msra.mxu0 0.0
      %78 = vmatpush.msra.mxu0 0.0
      %79 = vmatpush.msra.mxu0 0.0
      %80 = vmatpush.msra.mxu0 0.0
      %81 = vmatpush.msra.mxu0 %v57
      %82 = vmatmul.f32.gmra.mxu0 %v64
      %v83 = vpop.f32.mrf.mxu0
      %v84 = vadd.f32 %v60, %v83
      %85 = vdwg.mxu0
      %v86 = vld [vmem:[%s4] sm:$0x3]
      %v87 = vld [vmem:[%s5] sm:$0x1]
      %v89 = vperm.slane %v87, 0
      %vm91 = vcmask 15360
      %v93 = vsel %vm91, %v84, 0
      %vm95 = vcmask 1041408
      %v97 = vsel %vm95, %v86, 0
      %99 = vmatpush.msra.mxu0 0.0
      %100 = vmatpush.msra.mxu0 0.0
      %101 = vmatpush.msra.mxu0 0.0
      %102 = vmatpush.msra.mxu0 0.0
      %103 = vmatpush.msra.mxu0 0.0
      %104 = vmatpush.msra.mxu0 0.0
      %105 = vmatpush.msra.mxu0 0.0
      %106 = vmatpush.msra.mxu0 0.0
      %107 = vmatpush.msra.mxu0 0.0
      %108 = vmatpush.msra.mxu0 0.0
      %109 = vmatpush.msra.mxu0 0.0
      %110 = vmatpush.msra.mxu0 0.0
      %111 = vmatpush.msra.mxu0 0.0
      %112 = vmatpush.msra.mxu0 0.0
      %113 = vmatpush.msra.mxu0 0.0
      %114 = vmatpush.msra.mxu0 %v97
      %115 = vmatmul.f32.gmra.mxu0 %v93
      %v116 = vpop.f32.mrf.mxu0
      %v117 = vadd.f32 %v89, %v116
      %118 = vdwg.mxu0
      %v119 = vxor.u32 %v117, 2147483648
      %v120 = vmul.f32 %v119, 1.442695
      %v121 = vpow.pop %v120
      %v122 = vadd.f32 %v121, 1.0
      %v123 = vrcp.pop %v122
      %v124 = vmul.f32 %v122, %v123
      %v125 = vsub.f32 1.0, %v124
      %v126 = vmul.f32 %v123, %v125
      %v127 = vadd.f32 %v123, %v126
      %vm128 = vweird.f32 %v122
      %vm129 = vweird.f32 %v123
      %vm130 = vmor %vm128, %vm129
      %v131 = vsel %vm130, %v123, %v127
      %v132 = vand.u32 2147483647, %v122
      %vm133 = vcmp.eq.f32.partialorder %v132, 8.507059e+37
      %v134 = vand.u32 %v122, 2147483648
      %v135 = vor.u32 1.1754944e-38, %v134
      %v136 = vsel %vm133, %v135, %v131
      %v137 = vmul.f32 1.0, %v136
      %vm138 = vcmask 25600
      %139 = vst.msk [vmem:[#allocation6] sm:$0x3] %vm138, %v137
    $region37: #{tpu_custom_call.1} parent=1 // pred_fallthru
      _
    // Predicated region
    $region38: #{tpu_custom_call.1} parent=1 // pred_check
      _
    $region39: #{tpu_custom_call.1} parent=1 // pred_check_branch
      %141 = sbr.rel (0) target = $region41
    $region40: #{tpu_custom_call.1} parent=1 // pred_region
      %143 = vsyncadd [#allocation5], 0
      %s145 = sshll.u32 [#allocation6], 4
      %s146 = int_to_ptr.vmem [resolvable:$true] %s145
      %s147 = sshll.u32 %s6, 4
      %s148 = int_to_ptr.hbm [resolvable:$true] %s147
      %150 = dma.vmem_to_hbm [thread:$0]  %s146, 32, %s148, [#allocation5]
    $region41: #{tpu_custom_call.1} parent=1 // pred_fallthru
      _
    // Predicated region
    $region42: #{tpu_custom_call.1} parent=1 // pred_check
      _
    $region43: #{tpu_custom_call.1} parent=1 // pred_check_branch
      %152 = sbr.rel (0) target = $region45
    $region44: #{tpu_custom_call.1} parent=1 // pred_region
      %154 = dma.done [#allocation5], 32
    $region45: #{tpu_custom_call.1} parent=1 // pred_fallthru
      _
    %155 = vsyncpa [#allocation4], 1
    %156 = vsyncpa [#allocation5], 1

</llo_original>
